<compile_context>
chip_gen: v7x
topology: tpu7x:2x2x1
jax: 0.10.0
libtpu: 0.0.40
codegen_flags: <defaults>
</compile_context>

<pallas_src>
import functools

import jax
import jax.numpy as jnp
from jax.experimental import pallas as pl
from jax.experimental.pallas import tpu as pltpu

FEATURE_DIM = 16      # LOGG3D(feature_dim=16)
IN_CH = 4             # typical spvcnn input feats (x, y, z, intensity)
HIDDEN = 32
TILE_N_MAX = 8192     # points per grid step (channel-major -> cheap in VMEM)

# Packed-parameter column layout: [w1^T | b1 | w2^T | b2 | w3^T | b3]
_W1_LO, _W1_HI = 0, IN_CH
_B1_LO, _B1_HI = _W1_HI, _W1_HI + 1
_W2_LO, _W2_HI = _B1_HI, _B1_HI + HIDDEN
_B2_LO, _B2_HI = _W2_HI, _W2_HI + 1
_W3_LO, _W3_HI = _B2_HI, _B2_HI + HIDDEN
_B3_LO, _B3_HI = _W3_HI, _W3_HI + 1
_PACK_W = _B3_HI      # 71 columns


def _round_up(x, m):
    return (x + m - 1) // m * m


def _tpu_kind():
    try:
        return jax.devices()[0].device_kind.lower()
    except Exception:
        return ""


def _default_core_splits():
    # Two TensorCores per chip only on v7x; on single-TC chips (v5e/v6e) a
    # second split would just be a serial pass + extra partial-sum overhead.
    return 2 if "v7" in _tpu_kind() else 1


def _default_compute_dtype():
    # v5e has the lowest HBM bandwidth -> ship the point slab in bf16.
    # Accumulation / MLP math stays f32 (preferred_element_type below).
    k = _tpu_kind()
    if "v5e" in k or "v5 lite" in k or "v5lite" in k:
        return jnp.bfloat16
    return jnp.float32


def _pack_params(params):
    """Pack the six tiny weight/bias arrays into one [HIDDEN, _PACK_W] block."""
    w1, b1, w2, b2, w3, b3 = params
    p = jnp.zeros((HIDDEN, _PACK_W), jnp.float32)
    p = p.at[:, _W1_LO:_W1_HI].set(w1.T)
    p = p.at[:, _B1_LO].set(b1)
    p = p.at[:, _W2_LO:_W2_HI].set(w2.T)
    p = p.at[:, _B2_LO].set(b2)
    p = p.at[:FEATURE_DIM, _W3_LO:_W3_HI].set(w3.T)
    p = p.at[:FEATURE_DIM, _B3_LO].set(b3)
    return p


# ----------------------------------------------------------------------------
# Fused kernel: per-point MLP (channel-major) + SOP Gram accumulation.
# ----------------------------------------------------------------------------
def _fused_mlp_sop_kernel(nvalid_ref, x_ref, p_ref, o_ref, *,
                          tile_n, tiles_per_core):
    core = pl.program_id(0)
    step = pl.program_id(1)

    # Output block index is constant along the inner ("arbitrary") axis, so it
    # stays VMEM-resident: accumulate into it directly (no scratch / copy).
    @pl.when(step == 0)
    def _():
        o_ref[...] = jnp.zeros_like(o_ref)

    # Static slices out of the single packed parameter block.
    w1t = p_ref[:, _W1_LO:_W1_HI]               # [HIDDEN, IN_CH]
    b1 = p_ref[:, _B1_LO:_B1_HI]                # [HIDDEN, 1]
    w2t = p_ref[:, _W2_LO:_W2_HI]               # [HIDDEN, HIDDEN]
    b2 = p_ref[:, _B2_LO:_B2_HI]                # [HIDDEN, 1]
    w3t = p_ref[:FEATURE_DIM, _W3_LO:_W3_HI]    # [FEATURE_DIM, HIDDEN]
    b3 = p_ref[:FEATURE_DIM, _B3_LO:_B3_HI]     # [FEATURE_DIM, 1]

    # Channel-major slab -> points stay on the (lane-dense) lane axis.
    x = x_ref[...].astype(jnp.float32)          # [IN_CH, tile_n]
    h = jnp.dot(w1t, x, preferred_element_type=jnp.float32)   # [HIDDEN, tile_n]
    h = jnp.maximum(h + b1, 0.0)
    h = jnp.dot(w2t, h, preferred_element_type=jnp.float32)
    h = jnp.maximum(h + b2, 0.0)
    h = jnp.dot(w3t, h, preferred_element_type=jnp.float32) + b3
    # h: [FEATURE_DIM, tile_n]

    start = (core * tiles_per_core + step) * tile_n
    n_valid = nvalid_ref[0]

    @pl.when(start + tile_n <= n_valid)
    def _():
        # Interior tile: every column is a real point -> no mask cost.
        o_ref[0] = o_ref[0] + jax.lax.dot_general(
            h, h, (((1,), (1,)), ((), ())), preferred_element_type=jnp.float32)

    @pl.when(start + tile_n > n_valid)
    def _():
        # Boundary / fully-padded tile: zero the padded columns (the bias makes
        # zero-padded inputs nonzero after the MLP) before the Gram update.
        col = jax.lax.broadcasted_iota(jnp.int32, (1, tile_n), 1) + start
        hm = jnp.where(col < n_valid, h, 0.0)
        o_ref[0] = o_ref[0] + jax.lax.dot_general(
            hm, hm, (((1,), (1,)), ((), ())), preferred_element_type=jnp.float32)


def fused_point_mlp_sop(feats, params, *, tile_n_max=TILE_N_MAX,
                        num_core_splits=None, compute_dtype=None):
    """Returns mean_i f(x_i) f(x_i)^T as a [FEATURE_DIM, FEATURE_DIM] matrix."""
    n, c = feats.shape
    assert c == IN_CH, (c, IN_CH)
    if num_core_splits is None:
        num_core_splits = _default_core_splits()
    if compute_dtype is None:
        compute_dtype = _default_compute_dtype()

    w3 = params[4]
    out_dim = w3.shape[1]

    tile_n = min(tile_n_max, _round_up(n, 128))
    tiles_total = pl.cdiv(n, tile_n)
    tiles_per_core = pl.cdiv(tiles_total, num_core_splits)
    n_pad = tiles_per_core * num_core_splits * tile_n

    # Channel-major, lane-dense point slab: [IN_CH, n_pad].
    feats_t = feats.T.astype(compute_dtype)
    if n_pad != n:
        feats_t = jnp.pad(feats_t, ((0, 0), (0, n_pad - n)))

    packed = _pack_params(params)                 # [HIDDEN, _PACK_W] f32
    # Scalar-prefetched valid-point count: point clouds padding to the same
    # (tile_n, tiles_per_core) bucket share one Mosaic compile.
    n_valid = jnp.asarray([n], jnp.int32)

    kernel = functools.partial(_fused_mlp_sop_kernel, tile_n=tile_n,
                               tiles_per_core=tiles_per_core)

    partials = pl.pallas_call(
        kernel,
        out_shape=jax.ShapeDtypeStruct((num_core_splits, out_dim, out_dim),
                                       jnp.float32),
        grid_spec=pltpu.PrefetchScalarGridSpec(
            num_scalar_prefetch=1,
            grid=(num_core_splits, tiles_per_core),
            in_specs=[
                pl.BlockSpec((IN_CH, tile_n),
                             lambda core, i, nv: (0, core * tiles_per_core + i)),
                pl.BlockSpec(packed.shape, lambda core, i, nv: (0, 0)),
            ],
            out_specs=pl.BlockSpec((1, out_dim, out_dim),
                                   lambda core, i, nv: (core, 0, 0)),
        ),
        compiler_params=pltpu.CompilerParams(
            dimension_semantics=("parallel", "arbitrary")),
    )(n_valid, feats_t, packed)

    return jnp.sum(partials, axis=0) * (1.0 / n)


# ----------------------------------------------------------------------------
# LOGG3D forward
# ----------------------------------------------------------------------------
def logg3d_forward(coords, feats, params, num_batches):
    # torch.unique(x.C[:, -1], return_counts=True) -- counts are computed but
    # unused in the reference forward; reproduced for fidelity (glue).
    # NOTE: size= pads counts with zeros if fewer batches are present.
    _, counts = jnp.unique(coords[:, -1], return_counts=True, size=num_batches)

    # --- spvcnn(x) + sop(x), fused ---
    # TODO(synk): torchsparse sparse 3D voxel convolutions (SPVCNN stem /
    # encoder / decoder, voxelize / devoxelize) have no clean Pallas
    # equivalent; only the per-point linear branch is implemented, fused with
    # the SOP mean outer-product pooling.
    cov = fused_point_mlp_sop(feats, params)            # [16, 16]

    # Power-Euclidean (SOP do_pe): principal matrix square root via SVD.
    # Valid because cov is symmetric PSD (u ~= v); SVD sign/ordering wobble for
    # near-zero singular values is harmless for the subsequent norm.
    # TODO(synk): SVD has no Pallas lowering; plain JAX on the tiny 16x16 result.
    u, s, vh = jnp.linalg.svd(cov)
    cov = (u * jnp.sqrt(s)[None, :]) @ vh

    # signed_sqrt=False, do_fc=False -> skip those branches.
    # F.normalize(dim=-1): tiny 16x16 op, cheaper fused into the XLA graph.
    norm = jnp.sqrt(jnp.sum(cov * cov, axis=-1, keepdims=True))
    out = cov / jnp.maximum(norm, 1e-12)

    return jnp.squeeze(out), counts                     # torch.squeeze


def init_params(key):
    k1, k2, k3 = jax.random.split(key, 3)
    w1 = jax.random.normal(k1, (IN_CH, HIDDEN), jnp.float32) * 0.1
    b1 = jnp.zeros((HIDDEN,), jnp.float32)
    w2 = jax.random.normal(k2, (HIDDEN, HIDDEN), jnp.float32) * 0.1
    b2 = jnp.zeros((HIDDEN,), jnp.float32)
    w3 = jax.random.normal(k3, (HIDDEN, FEATURE_DIM), jnp.float32) * 0.1
    b3 = jnp.zeros((FEATURE_DIM,), jnp.float32)
    return (w1, b1, w2, b2, w3, b3)


if __name__ == "__main__":
    key = jax.random.PRNGKey(0)
    kc, kf, kp = jax.random.split(key, 3)

    B = 2
    N_PER_BATCH = 64
    N = B * N_PER_BATCH

    coords_xyz = jax.random.randint(kc, (N, 3), 0, 32, dtype=jnp.int32)
    batch_idx = jnp.repeat(jnp.arange(B, dtype=jnp.int32), N_PER_BATCH)[:, None]
    coords = jnp.concatenate([coords_xyz, batch_idx], axis=1)   # [N, 4] (x, y, z, batch)
    feats = jax.random.normal(kf, (N, IN_CH), jnp.float32)      # [N, 4]

    params = init_params(kp)

    out, counts = logg3d_forward(coords, feats, params, num_batches=B)
    out = jax.block_until_ready(out)
    counts = jax.block_until_ready(counts)

    assert out.shape == (FEATURE_DIM, FEATURE_DIM), out.shape
    assert bool(jnp.all(jnp.isfinite(out)))
    print("KERNEL_OK")
</pallas_src>

<mosaic_0001>
module attributes {stable_mosaic.version = 11 : i64} {
  func.func @_fused_mlp_sop_kernel(%arg0: i32, %arg1: i32, %arg2: memref<1xi32, #tpu.memory_space<smem>>, %arg3: memref<4x128xf32, #tpu.memory_space<vmem>>, %arg4: memref<32x71xf32, #tpu.memory_space<vmem>>, %arg5: memref<1x16x16xf32, #tpu.memory_space<vmem>>) attributes {dimension_semantics = [#tpu.dimension_semantics<parallel>, #tpu.dimension_semantics<arbitrary>], iteration_bounds = array<i64: 1, 1>, scalar_prefetch = 1 : i64, scratch_operands = 0 : i64, tpu.core_type = #tpu.core_type<tc>, window_params = [{transform_indices = @transform_0, window_bounds = array<i64: 4, 128>}, {pipeline_mode = #tpu.pipeline_mode<synchronous>, transform_indices = @transform_1, window_bounds = array<i64: 32, 71>}, {transform_indices = @transform_2, window_bounds = array<i64: 1, 16, 16>}]} {
    %c0_i32 = arith.constant 0 : i32
    %0 = arith.cmpi eq, %arg1, %c0_i32 : i32
    %1 = arith.extui %0 : i1 to i32
    %c0_i32_0 = arith.constant 0 : i32
    %2 = arith.cmpi ne, %1, %c0_i32_0 : i32
    scf.if %2 {
      %cst_18 = arith.constant 0.000000e+00 : f32
      %35 = vector.broadcast %cst_18 : f32 to vector<1x16x16xf32>
      %c0_19 = arith.constant 0 : index
      %c0_20 = arith.constant 0 : index
      %c0_21 = arith.constant 0 : index
      %36 = vector.load %arg5[%c0_19, %c0_20, %c0_21] : memref<1x16x16xf32, #tpu.memory_space<vmem>>, vector<1x16x16xf32>
      tpu.vector_store %arg5[%c0_19, %c0_20, %c0_21], %35 {strides = array<i32>} : memref<1x16x16xf32, #tpu.memory_space<vmem>>, vector<1x16x16xf32>,
    } else {
    }
    %c0 = arith.constant 0 : index
    %c0_1 = arith.constant 0 : index
    %3 = vector.load %arg4[%c0, %c0_1] : memref<32x71xf32, #tpu.memory_space<vmem>>, vector<32x4xf32>
    %c0_2 = arith.constant 0 : index
    %c4 = arith.constant 4 : index
    %4 = vector.load %arg4[%c0_2, %c4] : memref<32x71xf32, #tpu.memory_space<vmem>>, vector<32x1xf32>
    %c0_3 = arith.constant 0 : index
    %c5 = arith.constant 5 : index
    %5 = vector.load %arg4[%c0_3, %c5] : memref<32x71xf32, #tpu.memory_space<vmem>>, vector<32x32xf32>
    %c0_4 = arith.constant 0 : index
    %c37 = arith.constant 37 : index
    %6 = vector.load %arg4[%c0_4, %c37] : memref<32x71xf32, #tpu.memory_space<vmem>>, vector<32x1xf32>
    %c0_5 = arith.constant 0 : index
    %c38 = arith.constant 38 : index
    %7 = vector.load %arg4[%c0_5, %c38] : memref<32x71xf32, #tpu.memory_space<vmem>>, vector<16x32xf32>
    %c0_6 = arith.constant 0 : index
    %c70 = arith.constant 70 : index
    %8 = vector.load %arg4[%c0_6, %c70] : memref<32x71xf32, #tpu.memory_space<vmem>>, vector<16x1xf32>
    %c0_7 = arith.constant 0 : index
    %c0_8 = arith.constant 0 : index
    %9 = vector.load %arg3[%c0_7, %c0_8] : memref<4x128xf32, #tpu.memory_space<vmem>>, vector<4x128xf32>
    %cst = arith.constant dense<0.000000e+00> : vector<32x128xf32>
    %10 = tpu.matmul %3, %9, %cst {dimension_numbers = #tpu.dot_dimension_numbers<[1], [0], [0], [1], [0, 0, 1, 1], [], []>} : vector<32x4xf32>, vector<4x128xf32>, vector<32x128xf32> -> vector<32x128xf32>
    %11 = vector.broadcast %4 : vector<32x1xf32> to vector<32x128xf32>
    %12 = arith.addf %10, %11 : vector<32x128xf32>
    %cst_9 = arith.constant 0.000000e+00 : f32
    %13 = vector.broadcast %cst_9 : f32 to vector<32x128xf32>
    %14 = arith.maximumf %12, %13 : vector<32x128xf32>
    %cst_10 = arith.constant dense<0.000000e+00> : vector<32x128xf32>
    %15 = tpu.matmul %5, %14, %cst_10 {dimension_numbers = #tpu.dot_dimension_numbers<[1], [0], [0], [1], [0, 0, 1, 1], [], []>} : vector<32x32xf32>, vector<32x128xf32>, vector<32x128xf32> -> vector<32x128xf32>
    %16 = vector.broadcast %6 : vector<32x1xf32> to vector<32x128xf32>
    %17 = arith.addf %15, %16 : vector<32x128xf32>
    %cst_11 = arith.constant 0.000000e+00 : f32
    %18 = vector.broadcast %cst_11 : f32 to vector<32x128xf32>
    %19 = arith.maximumf %17, %18 : vector<32x128xf32>
    %cst_12 = arith.constant dense<0.000000e+00> : vector<16x128xf32>
    %20 = tpu.matmul %7, %19, %cst_12 {dimension_numbers = #tpu.dot_dimension_numbers<[1], [0], [0], [1], [0, 0, 1, 1], [], []>} : vector<16x32xf32>, vector<32x128xf32>, vector<16x128xf32> -> vector<16x128xf32>
    %21 = vector.broadcast %8 : vector<16x1xf32> to vector<16x128xf32>
    %22 = arith.addf %20, %21 : vector<16x128xf32>
    %c1_i32 = arith.constant 1 : i32
    %23 = arith.muli %arg0, %c1_i32 : i32
    %24 = arith.addi %23, %arg1 : i32
    %c128_i32 = arith.constant 128 : i32
    %25 = arith.muli %24, %c128_i32 : i32
    %c0_13 = arith.constant 0 : index
    %26 = memref.load %arg2[%c0_13] : memref<1xi32, #tpu.memory_space<smem>>
    %c128_i32_14 = arith.constant 128 : i32
    %27 = arith.addi %25, %c128_i32_14 : i32
    %28 = arith.cmpi sle, %27, %26 : i32
    %29 = arith.extui %28 : i1 to i32
    %c0_i32_15 = arith.constant 0 : i32
    %30 = arith.cmpi ne, %29, %c0_i32_15 : i32
    scf.if %30 {
      %c0_18 = arith.constant 0 : index
      %c0_19 = arith.constant 0 : index
      %c0_20 = arith.constant 0 : index
      %35 = vector.load %arg5[%c0_18, %c0_19, %c0_20] : memref<1x16x16xf32, #tpu.memory_space<vmem>>, vector<1x16x16xf32>
      %36 = vector.shape_cast %35 : vector<1x16x16xf32> to vector<16x16xf32>
      %cst_21 = arith.constant dense<0.000000e+00> : vector<16x16xf32>
      %37 = tpu.matmul %22, %22, %cst_21 {dimension_numbers = #tpu.dot_dimension_numbers<[1], [1], [0], [0], [0, 0, 1, 0], [], []>} : vector<16x128xf32>, vector<16x128xf32>, vector<16x16xf32> -> vector<16x16xf32>
      %38 = arith.addf %36, %37 : vector<16x16xf32>
      %c0_22 = arith.constant 0 : index
      %c0_23 = arith.constant 0 : index
      %c0_24 = arith.constant 0 : index
      %39 = vector.load %arg5[%c0_22, %c0_23, %c0_24] : memref<1x16x16xf32, #tpu.memory_space<vmem>>, vector<1x16x16xf32>
      %40 = vector.shape_cast %39 : vector<1x16x16xf32> to vector<16x16xf32>
      %41 = vector.shape_cast %38 : vector<16x16xf32> to vector<1x16x16xf32>
      tpu.vector_store %arg5[%c0_22, %c0_23, %c0_24], %41 {strides = array<i32>} : memref<1x16x16xf32, #tpu.memory_space<vmem>>, vector<1x16x16xf32>,
    } else {
    }
    %c128_i32_16 = arith.constant 128 : i32
    %31 = arith.addi %25, %c128_i32_16 : i32
    %32 = arith.cmpi sgt, %31, %26 : i32
    %33 = arith.extui %32 : i1 to i32
    %c0_i32_17 = arith.constant 0 : i32
    %34 = arith.cmpi ne, %33, %c0_i32_17 : i32
    scf.if %34 {
      %35 = tpu.iota {dimensions = array<i32: 1>} : vector<1x128xi32>
      %36 = vector.broadcast %25 : i32 to vector<1x128xi32>
      %37 = arith.addi %35, %36 : vector<1x128xi32>
      %38 = vector.broadcast %26 : i32 to vector<1x128xi32>
      %39 = arith.cmpi slt, %37, %38 : vector<1x128xi32>
      %cst_18 = arith.constant 0.000000e+00 : f32
      %40 = vector.shape_cast %39 : vector<1x128xi1> to vector<1x128xi1>
      %41 = vector.broadcast %40 : vector<1x128xi1> to vector<16x128xi1>
      %42 = vector.broadcast %cst_18 : f32 to vector<16x128xf32>
      %43 = arith.select %41, %22, %42 : vector<16x128xi1>, vector<16x128xf32>
      %c0_19 = arith.constant 0 : index
      %c0_20 = arith.constant 0 : index
      %c0_21 = arith.constant 0 : index
      %44 = vector.load %arg5[%c0_19, %c0_20, %c0_21] : memref<1x16x16xf32, #tpu.memory_space<vmem>>, vector<1x16x16xf32>
      %45 = vector.shape_cast %44 : vector<1x16x16xf32> to vector<16x16xf32>
      %cst_22 = arith.constant dense<0.000000e+00> : vector<16x16xf32>
      %46 = tpu.matmul %43, %43, %cst_22 {dimension_numbers = #tpu.dot_dimension_numbers<[1], [1], [0], [0], [0, 0, 1, 0], [], []>} : vector<16x128xf32>, vector<16x128xf32>, vector<16x16xf32> -> vector<16x16xf32>
      %47 = arith.addf %45, %46 : vector<16x16xf32>
      %c0_23 = arith.constant 0 : index
      %c0_24 = arith.constant 0 : index
      %c0_25 = arith.constant 0 : index
      %48 = vector.load %arg5[%c0_23, %c0_24, %c0_25] : memref<1x16x16xf32, #tpu.memory_space<vmem>>, vector<1x16x16xf32>
      %49 = vector.shape_cast %48 : vector<1x16x16xf32> to vector<16x16xf32>
      %50 = vector.shape_cast %47 : vector<16x16xf32> to vector<1x16x16xf32>
      tpu.vector_store %arg5[%c0_23, %c0_24, %c0_25], %50 {strides = array<i32>} : memref<1x16x16xf32, #tpu.memory_space<vmem>>, vector<1x16x16xf32>,
    } else {
    }
    return
  }
  func.func @transform_0(%arg0: i32, %arg1: i32, %arg2: memref<1xi32, #tpu.memory_space<smem>>) -> (i32, i32) {
    %c1_i32 = arith.constant 1 : i32
    %0 = arith.muli %arg0, %c1_i32 : i32
    %1 = arith.addi %0, %arg1 : i32
    %c0_i32 = arith.constant 0 : i32
    %c0_i32_0 = arith.constant 0 : i32
    return %c0_i32, %1 : i32, i32
  }
  func.func @transform_1(%arg0: i32, %arg1: i32, %arg2: memref<1xi32, #tpu.memory_space<smem>>) -> (i32, i32) {
    %c0_i32 = arith.constant 0 : i32
    %c0_i32_0 = arith.constant 0 : i32
    %c0_i32_1 = arith.constant 0 : i32
    return %c0_i32, %c0_i32_0 : i32, i32
  }
  func.func @transform_2(%arg0: i32, %arg1: i32, %arg2: memref<1xi32, #tpu.memory_space<smem>>) -> (i32, i32, i32) {
    %c0_i32 = arith.constant 0 : i32
    %c0_i32_0 = arith.constant 0 : i32
    %c0_i32_1 = arith.constant 0 : i32
    return %arg0, %c0_i32, %c0_i32_0 : i32, i32, i32
  }
}

</mosaic_0001>

<llo_original>
// kernel: tpu_custom_call.1
$region0: #{tpu_custom_call.1}
  #allocation0 [shape = 'u32[]', space=smem, size = 0x4, offset = 0x4, fixed_abs, tag = 'smem constant byte address 0x4 - core index']
  #allocation1 [shape = 'u32[144,128]{1,0:T(1,128)}', space=vmem, size = 0x12000, scoped, tag = 'internal scratch']
  #allocation2 [shape = 's32[1]{0}', space=sflag, size = 0x4, scoped, tag = 'scoped memory for tpu_custom_call.1']
  #allocation3 [shape = 's32[1]{0:T(128)S(6)}', space=smem, size = 0x200, scoped, tag = 'prefetched SMEM operand 0']
  %s0 = inlined_call_operand.<no memory space> [shape: s32[1], index: 0, kind: input, shape index: {}]
  %s1 = inlined_call_operand.hbm [shape: f32[4,128], index: 1, kind: input, shape index: {}]
  %s2 = inlined_call_operand.hbm [shape: f32[32,71], index: 2, kind: input, shape index: {}]
  %s3 = inlined_call_operand.hbm [shape: f32[1,16,16], index: 3, kind: output, shape index: {}]
  %s4 = sld [smem:[#allocation0]]
  $region38: #{tpu_custom_call.1} parent=0
    _
  %s6 = ssub.s32 1, %s4
  %s7 = scalar_select 0, %s6, %s4
  %8 = sst [smem:[#allocation3]] %s0
  $region1: #{tpu_custom_call.1} parent=0
    #allocation4 [shape = 'u8[2048]{0}', space=vmem, size = 0x800, scoped, tag = 'input window, operand 1, single buffered']
    #allocation5 [shape = 's32[1]{0}', space=sflag, size = 0x4, scoped, tag = 'scoped memory for tpu_custom_call.1']
    #allocation6 [shape = 's32[1]{0}', space=sflag, size = 0x4, scoped, tag = 'scoped memory for tpu_custom_call.1']
    #allocation7 [shape = 'u8[16384]{0}', space=vmem, size = 0x4000, scoped, tag = 'input window, operand 2, single buffered']
    #allocation8 [shape = 's32[1]{0}', space=sflag, size = 0x4, scoped, tag = 'scoped memory for tpu_custom_call.1']
    #allocation9 [shape = 'u8[8192]{0}', space=vmem, size = 0x2000, scoped, tag = 'output window, operand 0, single buffered']
    %9 = vsyncpa [#allocation5], 0
    %10 = vsyncpa [#allocation8], 0
    %11 = vsyncpa [#allocation6], 0
    // Predicated region
    $region2: #{tpu_custom_call.1} parent=1 // pred_check
      _
    $region3: #{tpu_custom_call.1} parent=1 // pred_check_branch
      %13 = sbr.rel (0) target = $region5
    $region4: #{tpu_custom_call.1} parent=1 // pred_region
      %s14 = sadd.s32 0, 0
      %s16 = ssub.s32 64, 64
      %17 = vsyncadd [#allocation5], %s16
      %s18 = smul.addr %s14, 64
      %s19 = scalar_lea.hbm %s1, %s18
      %s21 = sshll.u32 [#allocation4], 4
      %s22 = int_to_ptr.vmem [resolvable:$true] %s21
      %24 = dma.hbm_to_vmem [thread:$0]  %s19, 64, %s22, [#allocation5]
    $region5: #{tpu_custom_call.1} parent=1 // pred_fallthru
      _
    // Predicated region
    $region6: #{tpu_custom_call.1} parent=1 // pred_check
      _
    $region7: #{tpu_custom_call.1} parent=1 // pred_check_branch
      %26 = sbr.rel (0) target = $region9
    $region8: #{tpu_custom_call.1} parent=1 // pred_region
      %s28 = ssub.s32 512, 512
      %29 = vsyncadd [#allocation8], %s28
      %s30 = sshll.u32 [#allocation7], 4
      %s31 = int_to_ptr.vmem [resolvable:$true] %s30
      %36 = dma.hbm_to_vmem [thread:$0]  %s2, 512, %s31, [#allocation8], 128, 128, 8
    $region9: #{tpu_custom_call.1} parent=1 // pred_fallthru
      _
    // Predicated region
    $region10: #{tpu_custom_call.1} parent=1 // pred_check
      _
    $region11: #{tpu_custom_call.1} parent=1 // pred_check_branch
      %38 = sbr.rel (0) target = $region13
    $region12: #{tpu_custom_call.1} parent=1 // pred_region
      %39 = dma.done [#allocation5], 64
    $region13: #{tpu_custom_call.1} parent=1 // pred_fallthru
      _
    // Predicated region
    $region14: #{tpu_custom_call.1} parent=1 // pred_check
      _
    $region15: #{tpu_custom_call.1} parent=1 // pred_check_branch
      %41 = sbr.rel (0) target = $region17
    $region16: #{tpu_custom_call.1} parent=1 // pred_region
      %42 = dma.done [#allocation8], 512
    $region17: #{tpu_custom_call.1} parent=1 // pred_fallthru
      _
    %s43 = sadd.s32 0, 0
    %p44 = scmp.eq.s32.totalorder 0, 0
    // Predicated region
    $region18: #{tpu_custom_call.1} parent=1 // pred_check
      %p45 = pneg %p44
    $region19: #{tpu_custom_call.1} parent=1 // pred_check_branch
      %47 = sbr.rel (%p45) target = $region21
    $region20: #{tpu_custom_call.1} parent=1 // pred_region
      %vm48 = vcmask 130048
      %49 = vst.msk [vmem:[#allocation9] sm:$0xff] %vm48, 0.0
      %50 = vst.msk [vmem:[#allocation9 + $0x8] sm:$0xff] %vm48, 0.0
    $region21: #{tpu_custom_call.1} parent=1 // pred_fallthru
      _
    %v51 = vld [vmem:[#allocation7] sm:$0xff]
    %v52 = vld [vmem:[#allocation7 + $0x8] sm:$0xff]
    %v53 = vld [vmem:[#allocation7 + $0x10] sm:$0xff]
    %v54 = vld [vmem:[#allocation7 + $0x18] sm:$0xff]
    %v55 = vld [vmem:[#allocation4] sm:$0xf]
    %57 = vset.pattern.permute.xlu0 4
    %58 = vperm.xlu0 %57, %v51
    %v59 = vpop.permute.xlu0 %58
    %62 = vset.pattern.permute.xlu0 4
    %63 = vperm.xlu0 %62, %v52
    %v64 = vpop.permute.xlu0 %63
    %67 = vset.pattern.permute.xlu0 4
    %68 = vperm.xlu0 %67, %v53
    %v69 = vpop.permute.xlu0 %68
    %72 = vset.pattern.permute.xlu0 4
    %73 = vperm.xlu0 %72, %v54
    %v74 = vpop.permute.xlu0 %73
    %vm76 = vcmask 31744
    %v77 = vsel %vm76, %v51, 0
    %v79 = vsel %vm76, %v52, 0
    %v81 = vsel %vm76, %v53, 0
    %v83 = vsel %vm76, %v54, 0
    %vm85 = vcmask 1043456
    %v87 = vsel %vm85, %v55, 0
    %89 = vmatprep.subr.mxu0 0.0
    %90 = vmatpush1.msra.mxu0 %v87
    %91 = vmatprep.subr.mxu0 0.0
    %92 = vmatpush1.msra.mxu0 0.0
    %93 = vmatprep.subr.mxu0 0.0
    %94 = vmatpush1.msra.mxu0 0.0
    %95 = vmatprep.subr.mxu0 0.0
    %96 = vmatpush1.msra.mxu0 0.0
    %97 = vmatprep.subr.mxu0 0.0
    %98 = vmatpush1.msra.mxu0 0.0
    %99 = vmatprep.subr.mxu0 0.0
    %100 = vmatpush1.msra.mxu0 0.0
    %101 = vmatprep.subr.mxu0 0.0
    %102 = vmatpush1.msra.mxu0 0.0
    %103 = vmatprep.subr.mxu0 0.0
    %104 = vmatpush1.msra.mxu0 0.0
    %105 = vmatprep.subr.mxu0 0.0
    %106 = vmatpush1.msra.mxu0 0.0
    %107 = vmatprep.subr.mxu0 0.0
    %108 = vmatpush1.msra.mxu0 0.0
    %109 = vmatprep.subr.mxu0 0.0
    %110 = vmatpush1.msra.mxu0 0.0
    %111 = vmatprep.subr.mxu0 0.0
    %112 = vmatpush1.msra.mxu0 0.0
    %113 = vmatprep.subr.mxu0 0.0
    %114 = vmatpush1.msra.mxu0 0.0
    %115 = vmatprep.subr.mxu0 0.0
    %116 = vmatpush1.msra.mxu0 0.0
    %117 = vmatprep.subr.mxu0 0.0
    %118 = vmatpush1.msra.mxu0 0.0
    %119 = vmatprep.subr.mxu0 0.0
    %120 = vmatpush1.msra.mxu0 0.0
    %121 = vmatprep.subr.mxu0 0.0
    %122 = vmatpush1.msra.mxu0 0.0
    %123 = vmatprep.subr.mxu0 0.0
    %124 = vmatpush1.msra.mxu0 0.0
    %125 = vmatprep.subr.mxu0 0.0
    %126 = vmatpush1.msra.mxu0 0.0
    %127 = vmatprep.subr.mxu0 0.0
    %128 = vmatpush1.msra.mxu0 0.0
    %129 = vmatprep.subr.mxu0 0.0
    %130 = vmatpush1.msra.mxu0 0.0
    %131 = vmatprep.subr.mxu0 0.0
    %132 = vmatpush1.msra.mxu0 0.0
    %133 = vmatprep.subr.mxu0 0.0
    %134 = vmatpush1.msra.mxu0 0.0
    %135 = vmatprep.subr.mxu0 0.0
    %136 = vmatpush1.msra.mxu0 0.0
    %137 = vmatprep.subr.mxu0 0.0
    %138 = vmatpush1.msra.mxu0 0.0
    %139 = vmatprep.subr.mxu0 0.0
    %140 = vmatpush1.msra.mxu0 0.0
    %141 = vmatprep.subr.mxu0 0.0
    %142 = vmatpush1.msra.mxu0 0.0
    %143 = vmatprep.subr.mxu0 0.0
    %144 = vmatpush1.msra.mxu0 0.0
    %145 = vmatprep.subr.mxu0 0.0
    %146 = vmatpush1.msra.mxu0 0.0
    %147 = vmatprep.subr.mxu0 0.0
    %148 = vmatpush1.msra.mxu0 0.0
    %149 = vmatprep.subr.mxu0 0.0
    %150 = vmatpush1.msra.mxu0 0.0
    %151 = vmatprep.subr.mxu0 0.0
    %152 = vmatpush1.msra.mxu0 0.0
    %153 = vmatprep.mubr.f32.mxu0 0.0
    %154 = vmatmul.mubr.f32.gmra.mrb[0].mxu0 %v77
    %v155 = vpop.f32.mrb[0].mxu0
    %v156 = vadd.f32 %v59, %v155
    %v157 = vpop.f32.mrb[0].mxu0
    %158 = vmatprep.mubr.f32.mxu0 0.0
    %159 = vmatmul.mubr.f32.gmra.mrb[0].mxu0 %v79
    %v160 = vpop.f32.mrb[0].mxu0
    %v161 = vadd.f32 %v64, %v160
    %v162 = vpop.f32.mrb[0].mxu0
    %163 = vmatprep.mubr.f32.mxu0 0.0
    %164 = vmatmul.mubr.f32.gmra.mrb[0].mxu0 %v81
    %v165 = vpop.f32.mrb[0].mxu0
    %v166 = vadd.f32 %v69, %v165
    %v167 = vpop.f32.mrb[0].mxu0
    %168 = vmatprep.mubr.f32.mxu0 0.0
    %169 = vmatmul.mubr.f32.gmra.mrb[0].mxu0 %v83
    %v170 = vpop.f32.mrb[0].mxu0
    %v171 = vadd.f32 %v74, %v170
    %v172 = vpop.f32.mrb[0].mxu0
    %173 = vdwg.mxu0
    %v174 = vmax.f32 %v156, 0.0
    %v175 = vmax.f32 %v161, 0.0
    %v176 = vmax.f32 %v166, 0.0
    %v177 = vmax.f32 %v171, 0.0
    %178 = vset.pattern.permute.xlu0 37
    %179 = vperm.xlu0 %178, %v51
    %v180 = vpop.permute.xlu0 %179
    %182 = vset.pattern.permute.xlu0 37
    %183 = vperm.xlu0 %182, %v52
    %v184 = vpop.permute.xlu0 %183
    %186 = vset.pattern.permute.xlu0 37
    %187 = vperm.xlu0 %186, %v53
    %v188 = vpop.permute.xlu0 %187
    %190 = vset.pattern.permute.xlu0 37
    %191 = vperm.xlu0 %190, %v54
    %v192 = vpop.permute.xlu0 %191
    %194 = vrot.lane.b32.xlu0 %v51, 123
    %v195 = vpop.permute.xlu0 %194
    %196 = vrot.lane.b32.xlu0 %v52, 123
    %v197 = vpop.permute.xlu0 %196
    %198 = vrot.lane.b32.xlu0 %v53, 123
    %v199 = vpop.permute.xlu0 %198
    %200 = vrot.lane.b32.xlu0 %v54, 123
    %v201 = vpop.permute.xlu0 %200
    %vm202 = vcmask 261120
    %v203 = vsel %vm202, %v195, 0
    %v205 = vsel %vm202, %v197, 0
    %v207 = vsel %vm202, %v199, 0
    %v209 = vsel %vm202, %v201, 0
    %211 = vmatprep.subr.mxu0 0.0
    %212 = vmatpush1.msra.mxu0 %v174
    %213 = vmatprep.subr.mxu0 0.0
    %214 = vmatpush1.msra.mxu0 %v175
    %215 = vmatprep.subr.mxu0 0.0
    %216 = vmatpush1.msra.mxu0 %v176
    %217 = vmatprep.subr.mxu0 0.0
    %218 = vmatpush1.msra.mxu0 %v177
    %219 = vmatprep.subr.mxu0 0.0
    %220 = vmatpush1.msra.mxu0 0.0
    %221 = vmatprep.subr.mxu0 0.0
    %222 = vmatpush1.msra.mxu0 0.0
    %223 = vmatprep.subr.mxu0 0.0
    %224 = vmatpush1.msra.mxu0 0.0
    %225 = vmatprep.subr.mxu0 0.0
    %226 = vmatpush1.msra.mxu0 0.0
    %227 = vmatprep.subr.mxu0 0.0
    %228 = vmatpush1.msra.mxu0 0.0
    %229 = vmatprep.subr.mxu0 0.0
    %230 = vmatpush1.msra.mxu0 0.0
    %231 = vmatprep.subr.mxu0 0.0
    %232 = vmatpush1.msra.mxu0 0.0
    %233 = vmatprep.subr.mxu0 0.0
    %234 = vmatpush1.msra.mxu0 0.0
    %235 = vmatprep.subr.mxu0 0.0
    %236 = vmatpush1.msra.mxu0 0.0
    %237 = vmatprep.subr.mxu0 0.0
    %238 = vmatpush1.msra.mxu0 0.0
    %239 = vmatprep.subr.mxu0 0.0
    %240 = vmatpush1.msra.mxu0 0.0
    %241 = vmatprep.subr.mxu0 0.0
    %242 = vmatpush1.msra.mxu0 0.0
    %243 = vmatprep.subr.mxu0 0.0
    %244 = vmatpush1.msra.mxu0 0.0
    %245 = vmatprep.subr.mxu0 0.0
    %246 = vmatpush1.msra.mxu0 0.0
    %247 = vmatprep.subr.mxu0 0.0
    %248 = vmatpush1.msra.mxu0 0.0
    %249 = vmatprep.subr.mxu0 0.0
    %250 = vmatpush1.msra.mxu0 0.0
    %251 = vmatprep.subr.mxu0 0.0
    %252 = vmatpush1.msra.mxu0 0.0
    %253 = vmatprep.subr.mxu0 0.0
    %254 = vmatpush1.msra.mxu0 0.0
    %255 = vmatprep.subr.mxu0 0.0
    %256 = vmatpush1.msra.mxu0 0.0
    %257 = vmatprep.subr.mxu0 0.0
    %258 = vmatpush1.msra.mxu0 0.0
    %259 = vmatprep.subr.mxu0 0.0
    %260 = vmatpush1.msra.mxu0 0.0
    %261 = vmatprep.subr.mxu0 0.0
    %262 = vmatpush1.msra.mxu0 0.0
    %263 = vmatprep.subr.mxu0 0.0
    %264 = vmatpush1.msra.mxu0 0.0
    %265 = vmatprep.subr.mxu0 0.0
    %266 = vmatpush1.msra.mxu0 0.0
    %267 = vmatprep.subr.mxu0 0.0
    %268 = vmatpush1.msra.mxu0 0.0
    %269 = vmatprep.subr.mxu0 0.0
    %270 = vmatpush1.msra.mxu0 0.0
    %271 = vmatprep.subr.mxu0 0.0
    %272 = vmatpush1.msra.mxu0 0.0
    %273 = vmatprep.subr.mxu0 0.0
    %274 = vmatpush1.msra.mxu0 0.0
    %275 = vmatprep.mubr.f32.mxu0 0.0
    %276 = vmatmul.mubr.f32.gmra.mrb[0].mxu0 %v203
    %v277 = vpop.f32.mrb[0].mxu0
    %v278 = vadd.f32 %v180, %v277
    %v279 = vpop.f32.mrb[0].mxu0
    %280 = vmatprep.mubr.f32.mxu0 0.0
    %281 = vmatmul.mubr.f32.gmra.mrb[0].mxu0 %v205
    %v282 = vpop.f32.mrb[0].mxu0
    %v283 = vadd.f32 %v184, %v282
    %v284 = vpop.f32.mrb[0].mxu0
    %285 = vmatprep.mubr.f32.mxu0 0.0
    %286 = vmatmul.mubr.f32.gmra.mrb[0].mxu0 %v207
    %v287 = vpop.f32.mrb[0].mxu0
    %v288 = vadd.f32 %v188, %v287
    %v289 = vpop.f32.mrb[0].mxu0
    %290 = vmatprep.mubr.f32.mxu0 0.0
    %291 = vmatmul.mubr.f32.gmra.mrb[0].mxu0 %v209
    %v292 = vpop.f32.mrb[0].mxu0
    %v293 = vadd.f32 %v192, %v292
    %v294 = vpop.f32.mrb[0].mxu0
    %295 = vdwg.mxu0
    %v296 = vmax.f32 %v278, 0.0
    %v297 = vmax.f32 %v283, 0.0
    %v298 = vmax.f32 %v288, 0.0
    %v299 = vmax.f32 %v293, 0.0
    %300 = vset.pattern.permute.xlu0 70
    %301 = vperm.xlu0 %300, %v51
    %v302 = vpop.permute.xlu0 %301
    %304 = vset.pattern.permute.xlu0 70
    %305 = vperm.xlu0 %304, %v52
    %v306 = vpop.permute.xlu0 %305
    %308 = vrot.lane.b32.xlu0 %v51, 90
    %v309 = vpop.permute.xlu0 %308
    %310 = vrot.lane.b32.xlu0 %v52, 90
    %v311 = vpop.permute.xlu0 %310
    %v312 = vsel %vm202, %v309, 0
    %v314 = vsel %vm202, %v311, 0
    %316 = vmatprep.subr.mxu0 0.0
    %317 = vmatpush1.msra.mxu0 %v296
    %318 = vmatprep.subr.mxu0 0.0
    %319 = vmatpush1.msra.mxu0 %v297
    %320 = vmatprep.subr.mxu0 0.0
    %321 = vmatpush1.msra.mxu0 %v298
    %322 = vmatprep.subr.mxu0 0.0
    %323 = vmatpush1.msra.mxu0 %v299
    %324 = vmatprep.subr.mxu0 0.0
    %325 = vmatpush1.msra.mxu0 0.0
    %326 = vmatprep.subr.mxu0 0.0
    %327 = vmatpush1.msra.mxu0 0.0
    %328 = vmatprep.subr.mxu0 0.0
    %329 = vmatpush1.msra.mxu0 0.0
    %330 = vmatprep.subr.mxu0 0.0
    %331 = vmatpush1.msra.mxu0 0.0
    %332 = vmatprep.subr.mxu0 0.0
    %333 = vmatpush1.msra.mxu0 0.0
    %334 = vmatprep.subr.mxu0 0.0
    %335 = vmatpush1.msra.mxu0 0.0
    %336 = vmatprep.subr.mxu0 0.0
    %337 = vmatpush1.msra.mxu0 0.0
    %338 = vmatprep.subr.mxu0 0.0
    %339 = vmatpush1.msra.mxu0 0.0
    %340 = vmatprep.subr.mxu0 0.0
    %341 = vmatpush1.msra.mxu0 0.0
    %342 = vmatprep.subr.mxu0 0.0
    %343 = vmatpush1.msra.mxu0 0.0
    %344 = vmatprep.subr.mxu0 0.0
    %345 = vmatpush1.msra.mxu0 0.0
    %346 = vmatprep.subr.mxu0 0.0
    %347 = vmatpush1.msra.mxu0 0.0
    %348 = vmatprep.subr.mxu0 0.0
    %349 = vmatpush1.msra.mxu0 0.0
    %350 = vmatprep.subr.mxu0 0.0
    %351 = vmatpush1.msra.mxu0 0.0
    %352 = vmatprep.subr.mxu0 0.0
    %353 = vmatpush1.msra.mxu0 0.0
    %354 = vmatprep.subr.mxu0 0.0
    %355 = vmatpush1.msra.mxu0 0.0
    %356 = vmatprep.subr.mxu0 0.0
    %357 = vmatpush1.msra.mxu0 0.0
    %358 = vmatprep.subr.mxu0 0.0
    %359 = vmatpush1.msra.mxu0 0.0
    %360 = vmatprep.subr.mxu0 0.0
    %361 = vmatpush1.msra.mxu0 0.0
    %362 = vmatprep.subr.mxu0 0.0
    %363 = vmatpush1.msra.mxu0 0.0
    %364 = vmatprep.subr.mxu0 0.0
    %365 = vmatpush1.msra.mxu0 0.0
    %366 = vmatprep.subr.mxu0 0.0
    %367 = vmatpush1.msra.mxu0 0.0
    %368 = vmatprep.subr.mxu0 0.0
    %369 = vmatpush1.msra.mxu0 0.0
    %370 = vmatprep.subr.mxu0 0.0
    %371 = vmatpush1.msra.mxu0 0.0
    %372 = vmatprep.subr.mxu0 0.0
    %373 = vmatpush1.msra.mxu0 0.0
    %374 = vmatprep.subr.mxu0 0.0
    %375 = vmatpush1.msra.mxu0 0.0
    %376 = vmatprep.subr.mxu0 0.0
    %377 = vmatpush1.msra.mxu0 0.0
    %378 = vmatprep.subr.mxu0 0.0
    %379 = vmatpush1.msra.mxu0 0.0
    %380 = vmatprep.mubr.f32.mxu0 0.0
    %381 = vmatmul.mubr.f32.gmra.mrb[0].mxu0 %v312
    %v382 = vpop.f32.mrb[0].mxu0
    %v383 = vadd.f32 %v302, %v382
    %v384 = vpop.f32.mrb[0].mxu0
    %385 = vmatprep.mubr.f32.mxu0 0.0
    %386 = vmatmul.mubr.f32.gmra.mrb[0].mxu0 %v314
    %v387 = vpop.f32.mrb[0].mxu0
    %v388 = vadd.f32 %v306, %v387
    %v389 = vpop.f32.mrb[0].mxu0
    %390 = vdwg.mxu0
    %s391 = sadd.s32 0, 0
    %s392 = smul.u32 %s391, 128
    %s393 = sld [smem:[#allocation3]]
    %s394 = sadd.s32 %s392, 128
    %p395 = scmp.le.s32.totalorder %s394, %s393
    // Predicated region
    $region22: #{tpu_custom_call.1} parent=1 // pred_check
      %p396 = pneg %p395
    $region23: #{tpu_custom_call.1} parent=1 // pred_check_branch
      %398 = sbr.rel (%p396) target = $region25
    $region24: #{tpu_custom_call.1} parent=1 // pred_region
      %v399 = vld [vmem:[#allocation9] sm:$0xff]
      %v400 = vld [vmem:[#allocation9 + $0x8] sm:$0xff]
      %401 = vmatprep.subr.mxu0 0.0
      %402 = vmatpush1.xpose.msra.mxu0 %v383
      %403 = vmatprep.subr.mxu0 0.0
      %404 = vmatpush1.xpose.msra.mxu0 %v388
      %405 = vmatprep.subr.mxu0 0.0
      %406 = vmatpush1.xpose.msra.mxu0 0.0
      %407 = vmatprep.subr.mxu0 0.0
      %408 = vmatpush1.xpose.msra.mxu0 0.0
      %409 = vmatprep.subr.mxu0 0.0
      %410 = vmatpush1.xpose.msra.mxu0 0.0
      %411 = vmatprep.subr.mxu0 0.0
      %412 = vmatpush1.xpose.msra.mxu0 0.0
      %413 = vmatprep.subr.mxu0 0.0
      %414 = vmatpush1.xpose.msra.mxu0 0.0
      %415 = vmatprep.subr.mxu0 0.0
      %416 = vmatpush1.xpose.msra.mxu0 0.0
      %417 = vmatprep.subr.mxu0 0.0
      %418 = vmatpush1.xpose.msra.mxu0 0.0
      %419 = vmatprep.subr.mxu0 0.0
      %420 = vmatpush1.xpose.msra.mxu0 0.0
      %421 = vmatprep.subr.mxu0 0.0
      %422 = vmatpush1.xpose.msra.mxu0 0.0
      %423 = vmatprep.subr.mxu0 0.0
      %424 = vmatpush1.xpose.msra.mxu0 0.0
      %425 = vmatprep.subr.mxu0 0.0
      %426 = vmatpush1.xpose.msra.mxu0 0.0
      %427 = vmatprep.subr.mxu0 0.0
      %428 = vmatpush1.xpose.msra.mxu0 0.0
      %429 = vmatprep.subr.mxu0 0.0
      %430 = vmatpush1.xpose.msra.mxu0 0.0
      %431 = vmatprep.subr.mxu0 0.0
      %432 = vmatpush1.xpose.msra.mxu0 0.0
      %433 = vmatprep.subr.mxu0 0.0
      %434 = vmatpush1.xpose.msra.mxu0 0.0
      %435 = vmatprep.subr.mxu0 0.0
      %436 = vmatpush1.xpose.msra.mxu0 0.0
      %437 = vmatprep.subr.mxu0 0.0
      %438 = vmatpush1.xpose.msra.mxu0 0.0
      %439 = vmatprep.subr.mxu0 0.0
      %440 = vmatpush1.xpose.msra.mxu0 0.0
      %441 = vmatprep.subr.mxu0 0.0
      %442 = vmatpush1.xpose.msra.mxu0 0.0
      %443 = vmatprep.subr.mxu0 0.0
      %444 = vmatpush1.xpose.msra.mxu0 0.0
      %445 = vmatprep.subr.mxu0 0.0
      %446 = vmatpush1.xpose.msra.mxu0 0.0
      %447 = vmatprep.subr.mxu0 0.0
      %448 = vmatpush1.xpose.msra.mxu0 0.0
      %449 = vmatprep.subr.mxu0 0.0
      %450 = vmatpush1.xpose.msra.mxu0 0.0
      %451 = vmatprep.subr.mxu0 0.0
      %452 = vmatpush1.xpose.msra.mxu0 0.0
      %453 = vmatprep.subr.mxu0 0.0
      %454 = vmatpush1.xpose.msra.mxu0 0.0
      %455 = vmatprep.subr.mxu0 0.0
      %456 = vmatpush1.xpose.msra.mxu0 0.0
      %457 = vmatprep.subr.mxu0 0.0
      %458 = vmatpush1.xpose.msra.mxu0 0.0
      %459 = vmatprep.subr.mxu0 0.0
      %460 = vmatpush1.xpose.msra.mxu0 0.0
      %461 = vmatprep.subr.mxu0 0.0
      %462 = vmatpush1.xpose.msra.mxu0 0.0
      %463 = vmatprep.subr.mxu0 0.0
      %464 = vmatpush1.xpose.msra.mxu0 0.0
      %465 = vmatprep.mubr.f32.mxu0 0.0
      %466 = vmatmul.mubr.f32.gmra.mrb[0].mxu0 %v383
      %v467 = vpop.f32.mrb[0].mxu0
      %v468 = vadd.f32 0.0, %v467
      %v469 = vpop.f32.mrb[0].mxu0
      %470 = vmatprep.mubr.f32.mxu0 0.0
      %471 = vmatmul.mubr.f32.gmra.mrb[0].mxu0 %v388
      %v472 = vpop.f32.mrb[0].mxu0
      %v473 = vadd.f32 0.0, %v472
      %v474 = vpop.f32.mrb[0].mxu0
      %475 = vdwg.mxu0
      %v476 = vadd.f32 %v399, %v468
      %v477 = vadd.f32 %v400, %v473
      %vm478 = vcmask 130048
      %479 = vst.msk [vmem:[#allocation9] sm:$0xff] %vm478, %v476
      %480 = vst.msk [vmem:[#allocation9 + $0x8] sm:$0xff] %vm478, %v477
    $region25: #{tpu_custom_call.1} parent=1 // pred_fallthru
      _
    %p481 = scmp.gt.s32.totalorder %s394, %s393
    // Predicated region
    $region26: #{tpu_custom_call.1} parent=1 // pred_check
      %p482 = pneg %p481
    $region27: #{tpu_custom_call.1} parent=1 // pred_check_branch
      %484 = sbr.rel (%p482) target = $region29
    $region28: #{tpu_custom_call.1} parent=1 // pred_region
      %v485 = vlaneseq
      %v486 = vand.u32 %v485, 127
      %v487 = vstv %s392
      %v488 = vadd.s32 %v486, %v487
      %v489 = vstv %s393
      %vm490 = vcmp.lt.s32.totalorder %v488, %v489
      %v491 = vsel %vm490, 1, 0
      %vm492 = vcmp.eq.s32.totalorder %v491, 1
      %v493 = vsel %vm492, %v383, 0.0
      %v494 = vsel %vm492, %v388, 0.0
      %v495 = vld [vmem:[#allocation9] sm:$0xff]
      %v496 = vld [vmem:[#allocation9 + $0x8] sm:$0xff]
      %497 = vmatprep.subr.mxu0 0.0
      %498 = vmatpush1.xpose.msra.mxu0 %v493
      %499 = vmatprep.subr.mxu0 0.0
      %500 = vmatpush1.xpose.msra.mxu0 %v494
      %501 = vmatprep.subr.mxu0 0.0
      %502 = vmatpush1.xpose.msra.mxu0 0.0
      %503 = vmatprep.subr.mxu0 0.0
      %504 = vmatpush1.xpose.msra.mxu0 0.0
      %505 = vmatprep.subr.mxu0 0.0
      %506 = vmatpush1.xpose.msra.mxu0 0.0
      %507 = vmatprep.subr.mxu0 0.0
      %508 = vmatpush1.xpose.msra.mxu0 0.0
      %509 = vmatprep.subr.mxu0 0.0
      %510 = vmatpush1.xpose.msra.mxu0 0.0
      %511 = vmatprep.subr.mxu0 0.0
      %512 = vmatpush1.xpose.msra.mxu0 0.0
      %513 = vmatprep.subr.mxu0 0.0
      %514 = vmatpush1.xpose.msra.mxu0 0.0
      %515 = vmatprep.subr.mxu0 0.0
      %516 = vmatpush1.xpose.msra.mxu0 0.0
      %517 = vmatprep.subr.mxu0 0.0
      %518 = vmatpush1.xpose.msra.mxu0 0.0
      %519 = vmatprep.subr.mxu0 0.0
      %520 = vmatpush1.xpose.msra.mxu0 0.0
      %521 = vmatprep.subr.mxu0 0.0
      %522 = vmatpush1.xpose.msra.mxu0 0.0
      %523 = vmatprep.subr.mxu0 0.0
      %524 = vmatpush1.xpose.msra.mxu0 0.0
      %525 = vmatprep.subr.mxu0 0.0
      %526 = vmatpush1.xpose.msra.mxu0 0.0
      %527 = vmatprep.subr.mxu0 0.0
      %528 = vmatpush1.xpose.msra.mxu0 0.0
      %529 = vmatprep.subr.mxu0 0.0
      %530 = vmatpush1.xpose.msra.mxu0 0.0
      %531 = vmatprep.subr.mxu0 0.0
      %532 = vmatpush1.xpose.msra.mxu0 0.0
      %533 = vmatprep.subr.mxu0 0.0
      %534 = vmatpush1.xpose.msra.mxu0 0.0
      %535 = vmatprep.subr.mxu0 0.0
      %536 = vmatpush1.xpose.msra.mxu0 0.0
      %537 = vmatprep.subr.mxu0 0.0
      %538 = vmatpush1.xpose.msra.mxu0 0.0
      %539 = vmatprep.subr.mxu0 0.0
      %540 = vmatpush1.xpose.msra.mxu0 0.0
      %541 = vmatprep.subr.mxu0 0.0
      %542 = vmatpush1.xpose.msra.mxu0 0.0
      %543 = vmatprep.subr.mxu0 0.0
      %544 = vmatpush1.xpose.msra.mxu0 0.0
      %545 = vmatprep.subr.mxu0 0.0
      %546 = vmatpush1.xpose.msra.mxu0 0.0
      %547 = vmatprep.subr.mxu0 0.0
      %548 = vmatpush1.xpose.msra.mxu0 0.0
      %549 = vmatprep.subr.mxu0 0.0
      %550 = vmatpush1.xpose.msra.mxu0 0.0
      %551 = vmatprep.subr.mxu0 0.0
      %552 = vmatpush1.xpose.msra.mxu0 0.0
      %553 = vmatprep.subr.mxu0 0.0
      %554 = vmatpush1.xpose.msra.mxu0 0.0
      %555 = vmatprep.subr.mxu0 0.0
      %556 = vmatpush1.xpose.msra.mxu0 0.0
      %557 = vmatprep.subr.mxu0 0.0
      %558 = vmatpush1.xpose.msra.mxu0 0.0
      %559 = vmatprep.subr.mxu0 0.0
      %560 = vmatpush1.xpose.msra.mxu0 0.0
      %561 = vmatprep.mubr.f32.mxu0 0.0
      %562 = vmatmul.mubr.f32.gmra.mrb[0].mxu0 %v493
      %v563 = vpop.f32.mrb[0].mxu0
      %v564 = vadd.f32 0.0, %v563
      %v565 = vpop.f32.mrb[0].mxu0
      %566 = vmatprep.mubr.f32.mxu0 0.0
      %567 = vmatmul.mubr.f32.gmra.mrb[0].mxu0 %v494
      %v568 = vpop.f32.mrb[0].mxu0
      %v569 = vadd.f32 0.0, %v568
      %v570 = vpop.f32.mrb[0].mxu0
      %571 = vdwg.mxu0
      %v572 = vadd.f32 %v495, %v564
      %v573 = vadd.f32 %v496, %v569
      %vm574 = vcmask 130048
      %575 = vst.msk [vmem:[#allocation9] sm:$0xff] %vm574, %v572
      %576 = vst.msk [vmem:[#allocation9 + $0x8] sm:$0xff] %vm574, %v573
    $region29: #{tpu_custom_call.1} parent=1 // pred_fallthru
      _
    // Predicated region
    $region30: #{tpu_custom_call.1} parent=1 // pred_check
      _
    $region31: #{tpu_custom_call.1} parent=1 // pred_check_branch
      %578 = sbr.rel (0) target = $region33
    $region32: #{tpu_custom_call.1} parent=1 // pred_region
      %s580 = ssub.s32 256, 256
      %581 = vsyncadd [#allocation6], %s580
      %s582 = sshll.u32 [#allocation9], 4
      %s583 = int_to_ptr.vmem [resolvable:$true] %s582
      %588 = dma.vmem_to_hbm [thread:$0]  %s583, 256, %s3, [#allocation6], 128, 128, 8
    $region33: #{tpu_custom_call.1} parent=1 // pred_fallthru
      _
    // Predicated region
    $region34: #{tpu_custom_call.1} parent=1 // pred_check
      _
    $region35: #{tpu_custom_call.1} parent=1 // pred_check_branch
      %590 = sbr.rel (0) target = $region37
    $region36: #{tpu_custom_call.1} parent=1 // pred_region
      %591 = dma.done [#allocation6], 256
    $region37: #{tpu_custom_call.1} parent=1 // pred_fallthru
      _
    %592 = vsyncpa [#allocation5], 1
    %593 = vsyncpa [#allocation8], 1
    %594 = vsyncpa [#allocation6], 1

</llo_original>
